<compile_context>
chip_gen: v6e
topology: v6e:2x2x1
jax: 0.10.0
libtpu: 0.0.40
codegen_flags: <defaults>
</compile_context>

<pallas_src>
import functools

import jax
import jax.numpy as jnp
from jax import lax
from jax.experimental import pallas as pl
from jax.experimental.pallas import tpu as pltpu


# ---------------------------------------------------------------------------
# Pallas kernel: masked attention over q / hs, weighted sums, fused output MLP.
# Grid = (B_pad // TB,); each step handles TB batch elements via 2-D matmuls with a
# block-diagonal batch mask.
# ---------------------------------------------------------------------------
def _multisql_kernel(*refs, use_hs, seq_q, seq_hs, out_lanes):
    if use_hs:
        q_ref, hs_ref, mkw_ref, lens_ref, w_att_ref, w_out_ref, bias_ref, out_ref = refs
    else:
        q_ref, mkw_ref, lens_ref, w_att_ref, w_out_ref, bias_ref, out_ref = refs

    bp = bias_ref[...]                 # (5, H) f32 bias / small-weight slab
    lens = lens_ref[...]               # (R, 4) int32: [q_lo, q_hi, hs_lo, hs_hi]
    mkw = mkw_ref[...]                 # (R, H) bf16, R = TB * Lm
    R = mkw.shape[0]

    def attend(enc, seq_len, w, bias_row, lo, hi):
        # enc: (TB*seq_len, H) bf16; w: (H, H) bf16; bias_row: (1, H) f32
        # lo/hi: (R, 1) int32 -- local column window of this row's own batch element.
        proj = jnp.dot(enc, w, preferred_element_type=jnp.float32) + bias_row   # (C, H)
        att = lax.dot_general(mkw, proj.astype(jnp.bfloat16),
                              (((1,), (1,)), ((), ())),
                              preferred_element_type=jnp.float32)               # (R, C)
        C = enc.shape[0]
        col = lax.broadcasted_iota(jnp.int32, (R, C), 1)
        own = (col >= lo) & (col < lo + seq_len)        # this row's batch element
        valid = (col >= lo) & (col < hi)                 # within its true length
        fill = jnp.where(own, jnp.float32(-100.0), jnp.float32(-jnp.inf))
        att = jnp.where(valid, att, fill)
        # row-wise softmax (f32); EUP reciprocal keeps the VPU free
        att = att - jnp.max(att, axis=-1, keepdims=True)
        p = jnp.exp(att)
        p = p * pl.reciprocal(jnp.sum(p, axis=-1, keepdims=True), approx=True)
        # weighted sum over the (own-batch) sequence positions
        return jnp.dot(p.astype(jnp.bfloat16), enc,
                       preferred_element_type=jnp.float32)                       # (R, H)

    q_w = attend(q_ref[...], seq_q, w_att_ref[0], bp[0:1, :],
                 lens[:, 0:1], lens[:, 1:2])

    # Output projection: three accumulated K=H dots (no lane concat).
    x = jnp.dot(q_w.astype(jnp.bfloat16), w_out_ref[0],
                preferred_element_type=jnp.float32)
    if use_hs:
        hs_w = attend(hs_ref[...], seq_hs, w_att_ref[1], bp[1:2, :],
                      lens[:, 2:3], lens[:, 3:4])
        x = x + jnp.dot(hs_w.astype(jnp.bfloat16), w_out_ref[1],
                        preferred_element_type=jnp.float32)
    x = x + jnp.dot(mkw, w_out_ref[2], preferred_element_type=jnp.float32)
    x = x + bp[2:3, :]
    t = jnp.tanh(x)                                                               # (R, H)

    # Final Linear(H, 1): VPU multiply + lane reduction, kept 2-D.
    score = jnp.sum(t * bp[3:4, :], axis=-1, keepdims=True) + bp[4:5, 0:1]        # (R, 1)

    # Single full-width, sublane/lane-dense store (wrapper reads lane 0).
    out_ref[...] = jnp.broadcast_to(score, (R, out_lanes))


def multisql_attention_score(q_enc, hs_enc, mkw_enc, q_len, hs_len, lin_params, use_hs):
    B, Lq, H = q_enc.shape
    Lm = mkw_enc.shape[1]
    Lhs = hs_enc.shape[1] if use_hs else 0
    OUT_LANES = 128

    # Batch tiling: TB multiple of 8 (dense stores), capped at 32 so the dense
    # block-diagonal attention product's O(TB) extra MXU work stays negligible and the
    # per-step VMEM footprint is tiny on every generation (v7x's 64 MiB included).
    B8 = ((B + 7) // 8) * 8
    TB = min(B8, 32)
    B_pad = ((B + TB - 1) // TB) * TB
    grid = (B_pad // TB,)

    def pad_batch(x):
        if x.shape[0] == B_pad:
            return x
        return jnp.pad(x, ((0, B_pad - B), (0, 0), (0, 0)))

    q2d = pad_batch(q_enc).astype(jnp.bfloat16).reshape(B_pad * Lq, H)
    mkw2d = pad_batch(mkw_enc).astype(jnp.bfloat16).reshape(B_pad * Lm, H)
    if use_hs:
        hs2d = pad_batch(hs_enc).astype(jnp.bfloat16).reshape(B_pad * Lhs, H)

    # Per-row mask windows (one row per (batch, mkw position)); local to the TB block.
    q_len_p = jnp.zeros((B_pad,), jnp.int32).at[:B].set(q_len.astype(jnp.int32))
    if use_hs:
        hs_len_p = jnp.zeros((B_pad,), jnp.int32).at[:B].set(hs_len.astype(jnp.int32))
    else:
        hs_len_p = jnp.zeros((B_pad,), jnp.int32)
    local_b = jnp.arange(B_pad, dtype=jnp.int32) % TB
    q_lo = local_b * Lq
    hs_lo = local_b * (Lhs if use_hs else 1)
    lens_cols = jnp.stack([q_lo, q_lo + q_len_p, hs_lo, hs_lo + hs_len_p], axis=1)
    lens_rows = jnp.repeat(lens_cols, Lm, axis=0)                      # (B_pad*Lm, 4)

    # Packed weights / biases.
    def wt(name):                     # pre-transposed (in, out) weight
        return lin_params[name][0].T.astype(jnp.float32)

    def bs(name):
        return lin_params[name][1].astype(jnp.float32)

    w_att = jnp.stack([wt('q_att'), wt('hs_att')], axis=0).astype(jnp.bfloat16)      # (2,H,H)
    w_out = jnp.stack([wt('multi_out_q'), wt('multi_out_hs'),
                       wt('multi_out_c')], axis=0).astype(jnp.bfloat16)              # (3,H,H)
    b_comb = bs('multi_out_q') + bs('multi_out_c')
    if use_hs:
        b_comb = b_comb + bs('multi_out_hs')      # int(use_hs)* drops bias too when False
    bias_pack = jnp.zeros((5, H), jnp.float32)
    bias_pack = bias_pack.at[0].set(bs('q_att'))
    bias_pack = bias_pack.at[1].set(bs('hs_att'))
    bias_pack = bias_pack.at[2].set(b_comb)
    bias_pack = bias_pack.at[3].set(wt('multi_out')[:, 0])
    bias_pack = bias_pack.at[4, 0].set(bs('multi_out')[0])

    kernel = functools.partial(_multisql_kernel, use_hs=bool(use_hs),
                               seq_q=Lq, seq_hs=Lhs, out_lanes=OUT_LANES)

    in_specs = [pl.BlockSpec((TB * Lq, H), lambda b: (b, 0))]
    args = [q2d]
    if use_hs:
        in_specs.append(pl.BlockSpec((TB * Lhs, H), lambda b: (b, 0)))
        args.append(hs2d)
    in_specs += [
        pl.BlockSpec((TB * Lm, H), lambda b: (b, 0)),
        pl.BlockSpec((TB * Lm, 4), lambda b: (b, 0)),
        pl.BlockSpec(w_att.shape, lambda b: (0, 0, 0)),
        pl.BlockSpec(w_out.shape, lambda b: (0, 0, 0)),
        pl.BlockSpec(bias_pack.shape, lambda b: (0, 0)),
    ]
    args += [mkw2d, lens_rows, w_att, w_out, bias_pack]

    grid_spec = pltpu.PrefetchScalarGridSpec(
        num_scalar_prefetch=0,
        grid=grid,
        in_specs=in_specs,
        out_specs=pl.BlockSpec((TB * Lm, OUT_LANES), lambda b: (b, 0)),
    )

    out = pl.pallas_call(
        kernel,
        grid_spec=grid_spec,
        out_shape=jax.ShapeDtypeStruct((B_pad * Lm, OUT_LANES), jnp.float32),
        compiler_params=pltpu.CompilerParams(
            dimension_semantics=("parallel",)),
    )(*args)

    return out[:, 0].reshape(B_pad, Lm)[:B]


# ---------------------------------------------------------------------------
# Bidirectional (packed-sequence) LSTM encoders in plain JAX (glue).
# All encoders x directions of a layer are fused into ONE lax.scan (grouped einsum per
# timestep); input projections are hoisted out of the recurrence.
# TODO(synk): the sequential recurrence itself stays in lax.scan (masked to match
# pack_padded_sequence semantics) rather than a Pallas kernel.
# ---------------------------------------------------------------------------
def run_fused_bilstms(inputs, lens_list, params_list):
    """inputs: list of (B, T_e, in_e) arrays; lens_list: list of (B,) int lengths;
       params_list: per-encoder list of per-layer ((fwd), (bwd)) LSTM params.
       Returns list of (B, T_e, 2H) outputs (zeros at padded timesteps)."""
    n_enc = len(inputs)
    n_layers = len(params_list[0])
    Ts = [x.shape[1] for x in inputs]
    Tmax = max(Ts)
    outs = [x.astype(jnp.float32) for x in inputs]

    for layer in range(n_layers):
        xproj_groups, whh_groups, lens_groups, is_bwd = [], [], [], []
        H = None
        for e in range(n_enc):
            (w_ih_f, w_hh_f, b_ih_f, b_hh_f), (w_ih_b, w_hh_b, b_ih_b, b_hh_b) = \
                params_list[e][layer]
            H4 = w_hh_f.shape[0]
            H = w_hh_f.shape[1]
            x = outs[e]
            Bb, T_e, in_dim = x.shape
            # One (B*T, in) @ (in, 8H) projection for both directions, hoisted out of scan.
            w_cat = jnp.concatenate([w_ih_f.T, w_ih_b.T], axis=1)
            xp = (x.reshape(Bb * T_e, in_dim) @ w_cat).reshape(Bb, T_e, 2 * H4)
            xp_f = xp[..., :H4] + (b_ih_f + b_hh_f)
            xp_b = xp[..., H4:] + (b_ih_b + b_hh_b)
            if T_e < Tmax:
                pad = ((0, 0), (0, Tmax - T_e), (0, 0))
                xp_f = jnp.pad(xp_f, pad)
                xp_b = jnp.pad(xp_b, pad)
            xproj_groups += [xp_f, xp_b]
            whh_groups += [w_hh_f.T, w_hh_b.T]
            lens_groups += [lens_list[e].astype(jnp.int32), lens_list[e].astype(jnp.int32)]
            is_bwd += [False, True]

        xproj = jnp.stack(xproj_groups, axis=0)        # (G, B, Tmax, 4H)
        whh = jnp.stack(whh_groups, axis=0)            # (G, H, 4H)
        lens = jnp.stack(lens_groups, axis=0)          # (G, B)
        bwd = jnp.asarray(is_bwd)                      # (G,) bool
        G, Bb = xproj.shape[0], xproj.shape[1]
        h0 = jnp.zeros((G, Bb, H), jnp.float32)
        c0 = jnp.zeros((G, Bb, H), jnp.float32)

        def step(carry, s):
            h, c = carry
            xf = lax.dynamic_index_in_dim(xproj, s, axis=2, keepdims=False)
            xb = lax.dynamic_index_in_dim(xproj, Tmax - 1 - s, axis=2, keepdims=False)
            xp_s = jnp.where(bwd[:, None, None], xb, xf)           # (G, B, 4H)
            t_eff = jnp.where(bwd, Tmax - 1 - s, s)                # (G,)
            valid = (t_eff[:, None] < lens)[:, :, None]            # (G, B, 1)
            gates = xp_s + jnp.einsum('gbh,ghk->gbk', h, whh)
            i, f, g, o = jnp.split(gates, 4, axis=-1)              # PyTorch order i,f,g,o
            i = jax.nn.sigmoid(i)
            f = jax.nn.sigmoid(f)
            g = jnp.tanh(g)
            o = jax.nn.sigmoid(o)
            c_new = f * c + i * g
            h_new = o * jnp.tanh(c_new)
            h = jnp.where(valid, h_new, h)
            c = jnp.where(valid, c_new, c)
            out_s = jnp.where(valid, h_new, 0.0)                   # packed: padding -> 0
            return (h, c), out_s

        _, scan_out = lax.scan(step, (h0, c0), jnp.arange(Tmax))
        scan_out = jnp.transpose(scan_out, (1, 2, 0, 3))           # (G, B, Tmax, H)

        new_outs = []
        for e in range(n_enc):
            fwd_o = scan_out[2 * e]
            bwd_o = scan_out[2 * e + 1][:, ::-1, :]
            new_outs.append(jnp.concatenate([fwd_o, bwd_o], axis=-1)[:, :Ts[e], :])
        outs = new_outs
    return outs


# ---------------------------------------------------------------------------
# Deterministic parameter init (shapes match the nn.Module __init__).
# ---------------------------------------------------------------------------
def init_lstm_params(key, input_size, hidden_size, num_layers):
    params = []
    for layer in range(num_layers):
        in_size = input_size if layer == 0 else 2 * hidden_size
        s = hidden_size ** -0.5
        dirs = []
        for _d in range(2):
            key, k1, k2, k3, k4 = jax.random.split(key, 5)
            w_ih = jax.random.uniform(k1, (4 * hidden_size, in_size), minval=-s, maxval=s)
            w_hh = jax.random.uniform(k2, (4 * hidden_size, hidden_size), minval=-s, maxval=s)
            b_ih = jax.random.uniform(k3, (4 * hidden_size,), minval=-s, maxval=s)
            b_hh = jax.random.uniform(k4, (4 * hidden_size,), minval=-s, maxval=s)
            dirs.append((w_ih, w_hh, b_ih, b_hh))
        params.append(dirs)
    return params, key


def init_linear(key, in_f, out_f):
    k1, k2 = jax.random.split(key)
    s = in_f ** -0.5
    w = jax.random.uniform(k1, (out_f, in_f), minval=-s, maxval=s)
    b = jax.random.uniform(k2, (out_f,), minval=-s, maxval=s)
    return w, b


def multisql_forward(params, q_emb, q_len, hs_emb, hs_len, mkw_emb, mkw_len, use_hs):
    if use_hs:
        q_enc, hs_enc, mkw_enc = run_fused_bilstms(
            [q_emb, hs_emb, mkw_emb], [q_len, hs_len, mkw_len],
            [params['q_lstm'], params['hs_lstm'], params['mkw_lstm']])
    else:
        # Dead hs path is skipped entirely (no hs LSTM, no hs DMA into the kernel).
        q_enc, mkw_enc = run_fused_bilstms(
            [q_emb, mkw_emb], [q_len, mkw_len],
            [params['q_lstm'], params['mkw_lstm']])
        hs_enc = None
    return multisql_attention_score(q_enc, hs_enc, mkw_enc, q_len, hs_len,
                                    params['linears'], use_hs)


# ---------------------------------------------------------------------------
# Pure-JAX reference of the attention / output head (for an in-script sanity check).
# ---------------------------------------------------------------------------
def reference_score(q_enc, hs_enc, mkw_enc, q_len, hs_len, lin, use_hs):
    def linear(name, x):
        w, b = lin[name]
        return x @ w.T + b

    def att_weighted(enc, lens):
        proj = enc
        att = jnp.einsum('bmh,blh->bml', mkw_enc, proj)
        col = jnp.arange(proj.shape[1])[None, None, :]
        att = jnp.where(col < lens[:, None, None], att, -100.0)
        p = jax.nn.softmax(att, axis=-1)
        return jnp.einsum('bml,blh->bmh', p, enc)

    q_w = att_weighted_with_proj = None  # placeholder to keep structure clear
    q_w = jnp.einsum('bml,blh->bmh',
                     jax.nn.softmax(
                         jnp.where(jnp.arange(q_enc.shape[1])[None, None, :] < q_len[:, None, None],
                                   jnp.einsum('bmh,blh->bml', mkw_enc, linear('q_att', q_enc)),
                                   -100.0), axis=-1),
                     q_enc)
    x = linear('multi_out_q', q_w) + linear('multi_out_c', mkw_enc)
    if use_hs:
        hs_w = jnp.einsum('bml,blh->bmh',
                          jax.nn.softmax(
                              jnp.where(jnp.arange(hs_enc.shape[1])[None, None, :] < hs_len[:, None, None],
                                        jnp.einsum('bmh,blh->bml', mkw_enc, linear('hs_att', hs_enc)),
                                        -100.0), axis=-1),
                          hs_enc)
        x = x + linear('multi_out_hs', hs_w)
    t = jnp.tanh(x)
    w_o, b_o = lin['multi_out']
    return (t @ w_o.T + b_o)[..., 0]


if __name__ == "__main__":
    # Module config: MultiSqlPredictor(N_word, N_col, N_h, N_depth, dropout, gpu, use_hs)
    N_word, N_col, N_h, N_depth = 16, 0, 32, 1
    use_hs = True
    B, Lq, Lhs, Lm = 2, 8, 5, 4
    H2 = N_h // 2

    key = jax.random.PRNGKey(0)
    key, kq, khs, kmkw = jax.random.split(key, 4)
    q_emb = jax.random.normal(kq, (B, Lq, N_word), jnp.float32)
    hs_emb = jax.random.normal(khs, (B, Lhs, N_word), jnp.float32)
    mkw_emb = jax.random.normal(kmkw, (B, Lm, N_word), jnp.float32)
    q_len = jnp.array([8, 6], jnp.int32)
    hs_len = jnp.array([5, 3], jnp.int32)
    mkw_len = jnp.array([4, 4], jnp.int32)

    # N_col is falsy here, so hs/mkw LSTMs also use N_word as input size.
    q_lstm_p, key = init_lstm_params(key, N_word, H2, N_depth)
    hs_lstm_p, key = init_lstm_params(key, N_word, H2, N_depth)
    mkw_lstm_p, key = init_lstm_params(key, N_word, H2, N_depth)

    lin = {}
    for name, (fin, fout) in [('q_att', (N_h, N_h)), ('hs_att', (N_h, N_h)),
                              ('multi_out_q', (N_h, N_h)), ('multi_out_hs', (N_h, N_h)),
                              ('multi_out_c', (N_h, N_h)), ('multi_out', (N_h, 1))]:
        key, sub = jax.random.split(key)
        lin[name] = init_linear(sub, fin, fout)

    params = {'q_lstm': q_lstm_p, 'hs_lstm': hs_lstm_p, 'mkw_lstm': mkw_lstm_p,
              'linears': lin}

    fwd = jax.jit(multisql_forward, static_argnames=('use_hs',))
    score = fwd(params, q_emb, q_len, hs_emb, hs_len, mkw_emb, mkw_len, use_hs=use_hs)
    score = jax.block_until_ready(score)
    assert score.shape == (B, Lm)
    assert bool(jnp.all(jnp.isfinite(score)))

    # Sanity check the Pallas head against a pure-JAX f32 reference on the same encodings
    # (loose tolerance: kernel uses bf16 MXU operands + approx reciprocal).
    q_enc, hs_enc, mkw_enc = run_fused_bilstms(
        [q_emb, hs_emb, mkw_emb], [q_len, hs_len, mkw_len],
        [params['q_lstm'], params['hs_lstm'], params['mkw_lstm']])
    ref = reference_score(q_enc, hs_enc, mkw_enc, q_len, hs_len, params['linears'], use_hs)
    assert bool(jnp.allclose(score, ref, rtol=5e-2, atol=5e-2))

    print("KERNEL_OK")
</pallas_src>

<mosaic_0001>
module attributes {stable_mosaic.version = 11 : i64} {
  func.func @_multisql_kernel(%arg0: i32, %arg1: memref<64x32xbf16, #tpu.memory_space<vmem>>, %arg2: memref<40x32xbf16, #tpu.memory_space<vmem>>, %arg3: memref<32x32xbf16, #tpu.memory_space<vmem>>, %arg4: memref<32x4xi32, #tpu.memory_space<vmem>>, %arg5: memref<2x32x32xbf16, #tpu.memory_space<vmem>>, %arg6: memref<3x32x32xbf16, #tpu.memory_space<vmem>>, %arg7: memref<5x32xf32, #tpu.memory_space<vmem>>, %arg8: memref<32x128xf32, #tpu.memory_space<vmem>>) attributes {dimension_semantics = [#tpu.dimension_semantics<parallel>], iteration_bounds = array<i64: 1>, scalar_prefetch = 0 : i64, scratch_operands = 0 : i64, tpu.core_type = #tpu.core_type<tc>, window_params = [{transform_indices = @transform_0, window_bounds = array<i64: 64, 32>}, {transform_indices = @transform_1, window_bounds = array<i64: 40, 32>}, {transform_indices = @transform_2, window_bounds = array<i64: 32, 32>}, {transform_indices = @transform_3, window_bounds = array<i64: 32, 4>}, {pipeline_mode = #tpu.pipeline_mode<synchronous>, transform_indices = @transform_4, window_bounds = array<i64: 2, 32, 32>}, {pipeline_mode = #tpu.pipeline_mode<synchronous>, transform_indices = @transform_5, window_bounds = array<i64: 3, 32, 32>}, {pipeline_mode = #tpu.pipeline_mode<synchronous>, transform_indices = @transform_6, window_bounds = array<i64: 5, 32>}, {transform_indices = @transform_7, window_bounds = array<i64: 32, 128>}]} {
    %c0 = arith.constant 0 : index
    %c0_0 = arith.constant 0 : index
    %0 = vector.load %arg7[%c0, %c0_0] : memref<5x32xf32, #tpu.memory_space<vmem>>, vector<5x32xf32>
    %c0_1 = arith.constant 0 : index
    %c0_2 = arith.constant 0 : index
    %1 = vector.load %arg4[%c0_1, %c0_2] : memref<32x4xi32, #tpu.memory_space<vmem>>, vector<32x4xi32>
    %c0_3 = arith.constant 0 : index
    %c0_4 = arith.constant 0 : index
    %2 = vector.load %arg3[%c0_3, %c0_4] : memref<32x32xbf16, #tpu.memory_space<vmem>>, vector<32x32xbf16>
    %c0_5 = arith.constant 0 : index
    %c0_6 = arith.constant 0 : index
    %3 = vector.load %arg1[%c0_5, %c0_6] : memref<64x32xbf16, #tpu.memory_space<vmem>>, vector<64x32xbf16>
    %c0_7 = arith.constant 0 : index
    %c0_8 = arith.constant 0 : index
    %c0_9 = arith.constant 0 : index
    %4 = vector.load %arg5[%c0_7, %c0_8, %c0_9] : memref<2x32x32xbf16, #tpu.memory_space<vmem>>, vector<1x32x32xbf16>
    %5 = vector.shape_cast %4 : vector<1x32x32xbf16> to vector<32x32xbf16>
    %6 = vector.extract_strided_slice %0 {offsets = [0, 0], sizes = [1, 32], strides = [1, 1]} : vector<5x32xf32> to vector<1x32xf32>
    %7 = vector.extract_strided_slice %1 {offsets = [0, 0], sizes = [32, 1], strides = [1, 1]} : vector<32x4xi32> to vector<32x1xi32>
    %8 = vector.extract_strided_slice %1 {offsets = [0, 1], sizes = [32, 1], strides = [1, 1]} : vector<32x4xi32> to vector<32x1xi32>
    %cst = arith.constant dense<0.000000e+00> : vector<64x32xf32>
    %9 = tpu.matmul %3, %5, %cst {dimension_numbers = #tpu.dot_dimension_numbers<[1], [0], [0], [1], [0, 0, 1, 1], [], []>} : vector<64x32xbf16>, vector<32x32xbf16>, vector<64x32xf32> -> vector<64x32xf32>
    %10 = vector.broadcast %6 : vector<1x32xf32> to vector<64x32xf32>
    %11 = arith.addf %9, %10 : vector<64x32xf32>
    %12 = arith.truncf %11 : vector<64x32xf32> to vector<64x32xbf16>
    %cst_10 = arith.constant dense<0.000000e+00> : vector<32x64xf32>
    %13 = tpu.matmul %2, %12, %cst_10 {dimension_numbers = #tpu.dot_dimension_numbers<[1], [1], [0], [0], [0, 0, 1, 0], [], []>} : vector<32x32xbf16>, vector<64x32xbf16>, vector<32x64xf32> -> vector<32x64xf32>
    %14 = tpu.iota {dimensions = array<i32: 1>} : vector<32x64xi32>
    %15 = vector.broadcast %7 : vector<32x1xi32> to vector<32x64xi32>
    %16 = arith.cmpi sge, %14, %15 : vector<32x64xi32>
    %c8_i32 = arith.constant 8 : i32
    %17 = vector.broadcast %c8_i32 : i32 to vector<32x1xi32>
    %18 = arith.addi %7, %17 : vector<32x1xi32>
    %19 = vector.broadcast %18 : vector<32x1xi32> to vector<32x64xi32>
    %20 = arith.cmpi slt, %14, %19 : vector<32x64xi32>
    %21 = arith.andi %16, %20 : vector<32x64xi1>
    %22 = vector.broadcast %7 : vector<32x1xi32> to vector<32x64xi32>
    %23 = arith.cmpi sge, %14, %22 : vector<32x64xi32>
    %24 = vector.broadcast %8 : vector<32x1xi32> to vector<32x64xi32>
    %25 = arith.cmpi slt, %14, %24 : vector<32x64xi32>
    %26 = arith.andi %23, %25 : vector<32x64xi1>
    %cst_11 = arith.constant -1.000000e+02 : f32
    %cst_12 = arith.constant 0xFF800000 : f32
    %27 = vector.broadcast %cst_11 : f32 to vector<32x64xf32>
    %28 = vector.broadcast %cst_12 : f32 to vector<32x64xf32>
    %29 = arith.select %21, %27, %28 : vector<32x64xi1>, vector<32x64xf32>
    %30 = arith.select %26, %13, %29 : vector<32x64xi1>, vector<32x64xf32>
    %cst_13 = arith.constant dense<0xFF800000> : vector<32xf32>
    %31 = vector.multi_reduction <maximumf>, %30, %cst_13 [1] : vector<32x64xf32> to vector<32xf32>
    %32 = vector.shape_cast %31 : vector<32xf32> to vector<32x1xf32>
    %33 = vector.broadcast %32 : vector<32x1xf32> to vector<32x64xf32>
    %34 = arith.subf %30, %33 : vector<32x64xf32>
    %35 = math.exp %34 : vector<32x64xf32>
    %cst_14 = arith.constant dense<0.000000e+00> : vector<32xf32>
    %36 = vector.multi_reduction <add>, %35, %cst_14 [1] : vector<32x64xf32> to vector<32xf32>
    %37 = vector.shape_cast %36 : vector<32xf32> to vector<32x1xf32>
    %38 = tpu.reciprocal %37 {approx = true} : vector<32x1xf32> -> vector<32x1xf32>
    %39 = vector.broadcast %38 : vector<32x1xf32> to vector<32x64xf32>
    %40 = arith.mulf %35, %39 : vector<32x64xf32>
    %41 = arith.truncf %40 : vector<32x64xf32> to vector<32x64xbf16>
    %cst_15 = arith.constant dense<0.000000e+00> : vector<32x32xf32>
    %42 = tpu.matmul %41, %3, %cst_15 {dimension_numbers = #tpu.dot_dimension_numbers<[1], [0], [0], [1], [0, 0, 1, 1], [], []>} : vector<32x64xbf16>, vector<64x32xbf16>, vector<32x32xf32> -> vector<32x32xf32>
    %43 = arith.truncf %42 : vector<32x32xf32> to vector<32x32xbf16>
    %c0_16 = arith.constant 0 : index
    %c0_17 = arith.constant 0 : index
    %c0_18 = arith.constant 0 : index
    %44 = vector.load %arg6[%c0_16, %c0_17, %c0_18] : memref<3x32x32xbf16, #tpu.memory_space<vmem>>, vector<1x32x32xbf16>
    %45 = vector.shape_cast %44 : vector<1x32x32xbf16> to vector<32x32xbf16>
    %cst_19 = arith.constant dense<0.000000e+00> : vector<32x32xf32>
    %46 = tpu.matmul %43, %45, %cst_19 {dimension_numbers = #tpu.dot_dimension_numbers<[1], [0], [0], [1], [0, 0, 1, 1], [], []>} : vector<32x32xbf16>, vector<32x32xbf16>, vector<32x32xf32> -> vector<32x32xf32>
    %c0_20 = arith.constant 0 : index
    %c0_21 = arith.constant 0 : index
    %47 = vector.load %arg2[%c0_20, %c0_21] : memref<40x32xbf16, #tpu.memory_space<vmem>>, vector<40x32xbf16>
    %c1 = arith.constant 1 : index
    %c0_22 = arith.constant 0 : index
    %c0_23 = arith.constant 0 : index
    %48 = vector.load %arg5[%c1, %c0_22, %c0_23] : memref<2x32x32xbf16, #tpu.memory_space<vmem>>, vector<1x32x32xbf16>
    %49 = vector.shape_cast %48 : vector<1x32x32xbf16> to vector<32x32xbf16>
    %50 = vector.extract_strided_slice %0 {offsets = [1, 0], sizes = [1, 32], strides = [1, 1]} : vector<5x32xf32> to vector<1x32xf32>
    %51 = vector.extract_strided_slice %1 {offsets = [0, 2], sizes = [32, 1], strides = [1, 1]} : vector<32x4xi32> to vector<32x1xi32>
    %52 = vector.extract_strided_slice %1 {offsets = [0, 3], sizes = [32, 1], strides = [1, 1]} : vector<32x4xi32> to vector<32x1xi32>
    %cst_24 = arith.constant dense<0.000000e+00> : vector<40x32xf32>
    %53 = tpu.matmul %47, %49, %cst_24 {dimension_numbers = #tpu.dot_dimension_numbers<[1], [0], [0], [1], [0, 0, 1, 1], [], []>} : vector<40x32xbf16>, vector<32x32xbf16>, vector<40x32xf32> -> vector<40x32xf32>
    %54 = vector.broadcast %50 : vector<1x32xf32> to vector<40x32xf32>
    %55 = arith.addf %53, %54 : vector<40x32xf32>
    %56 = arith.truncf %55 : vector<40x32xf32> to vector<40x32xbf16>
    %cst_25 = arith.constant dense<0.000000e+00> : vector<32x40xf32>
    %57 = tpu.matmul %2, %56, %cst_25 {dimension_numbers = #tpu.dot_dimension_numbers<[1], [1], [0], [0], [0, 0, 1, 0], [], []>} : vector<32x32xbf16>, vector<40x32xbf16>, vector<32x40xf32> -> vector<32x40xf32>
    %58 = tpu.iota {dimensions = array<i32: 1>} : vector<32x40xi32>
    %59 = vector.broadcast %51 : vector<32x1xi32> to vector<32x40xi32>
    %60 = arith.cmpi sge, %58, %59 : vector<32x40xi32>
    %c5_i32 = arith.constant 5 : i32
    %61 = vector.broadcast %c5_i32 : i32 to vector<32x1xi32>
    %62 = arith.addi %51, %61 : vector<32x1xi32>
    %63 = vector.broadcast %62 : vector<32x1xi32> to vector<32x40xi32>
    %64 = arith.cmpi slt, %58, %63 : vector<32x40xi32>
    %65 = arith.andi %60, %64 : vector<32x40xi1>
    %66 = vector.broadcast %51 : vector<32x1xi32> to vector<32x40xi32>
    %67 = arith.cmpi sge, %58, %66 : vector<32x40xi32>
    %68 = vector.broadcast %52 : vector<32x1xi32> to vector<32x40xi32>
    %69 = arith.cmpi slt, %58, %68 : vector<32x40xi32>
    %70 = arith.andi %67, %69 : vector<32x40xi1>
    %cst_26 = arith.constant -1.000000e+02 : f32
    %cst_27 = arith.constant 0xFF800000 : f32
    %71 = vector.broadcast %cst_26 : f32 to vector<32x40xf32>
    %72 = vector.broadcast %cst_27 : f32 to vector<32x40xf32>
    %73 = arith.select %65, %71, %72 : vector<32x40xi1>, vector<32x40xf32>
    %74 = arith.select %70, %57, %73 : vector<32x40xi1>, vector<32x40xf32>
    %cst_28 = arith.constant dense<0xFF800000> : vector<32xf32>
    %75 = vector.multi_reduction <maximumf>, %74, %cst_28 [1] : vector<32x40xf32> to vector<32xf32>
    %76 = vector.shape_cast %75 : vector<32xf32> to vector<32x1xf32>
    %77 = vector.broadcast %76 : vector<32x1xf32> to vector<32x40xf32>
    %78 = arith.subf %74, %77 : vector<32x40xf32>
    %79 = math.exp %78 : vector<32x40xf32>
    %cst_29 = arith.constant dense<0.000000e+00> : vector<32xf32>
    %80 = vector.multi_reduction <add>, %79, %cst_29 [1] : vector<32x40xf32> to vector<32xf32>
    %81 = vector.shape_cast %80 : vector<32xf32> to vector<32x1xf32>
    %82 = tpu.reciprocal %81 {approx = true} : vector<32x1xf32> -> vector<32x1xf32>
    %83 = vector.broadcast %82 : vector<32x1xf32> to vector<32x40xf32>
    %84 = arith.mulf %79, %83 : vector<32x40xf32>
    %85 = arith.truncf %84 : vector<32x40xf32> to vector<32x40xbf16>
    %cst_30 = arith.constant dense<0.000000e+00> : vector<32x32xf32>
    %86 = tpu.matmul %85, %47, %cst_30 {dimension_numbers = #tpu.dot_dimension_numbers<[1], [0], [0], [1], [0, 0, 1, 1], [], []>} : vector<32x40xbf16>, vector<40x32xbf16>, vector<32x32xf32> -> vector<32x32xf32>
    %87 = arith.truncf %86 : vector<32x32xf32> to vector<32x32xbf16>
    %c1_31 = arith.constant 1 : index
    %c0_32 = arith.constant 0 : index
    %c0_33 = arith.constant 0 : index
    %88 = vector.load %arg6[%c1_31, %c0_32, %c0_33] : memref<3x32x32xbf16, #tpu.memory_space<vmem>>, vector<1x32x32xbf16>
    %89 = vector.shape_cast %88 : vector<1x32x32xbf16> to vector<32x32xbf16>
    %cst_34 = arith.constant dense<0.000000e+00> : vector<32x32xf32>
    %90 = tpu.matmul %87, %89, %cst_34 {dimension_numbers = #tpu.dot_dimension_numbers<[1], [0], [0], [1], [0, 0, 1, 1], [], []>} : vector<32x32xbf16>, vector<32x32xbf16>, vector<32x32xf32> -> vector<32x32xf32>
    %91 = arith.addf %46, %90 : vector<32x32xf32>
    %c2 = arith.constant 2 : index
    %c0_35 = arith.constant 0 : index
    %c0_36 = arith.constant 0 : index
    %92 = vector.load %arg6[%c2, %c0_35, %c0_36] : memref<3x32x32xbf16, #tpu.memory_space<vmem>>, vector<1x32x32xbf16>
    %93 = vector.shape_cast %92 : vector<1x32x32xbf16> to vector<32x32xbf16>
    %cst_37 = arith.constant dense<0.000000e+00> : vector<32x32xf32>
    %94 = tpu.matmul %2, %93, %cst_37 {dimension_numbers = #tpu.dot_dimension_numbers<[1], [0], [0], [1], [0, 0, 1, 1], [], []>} : vector<32x32xbf16>, vector<32x32xbf16>, vector<32x32xf32> -> vector<32x32xf32>
    %95 = arith.addf %91, %94 : vector<32x32xf32>
    %96 = vector.extract_strided_slice %0 {offsets = [2, 0], sizes = [1, 32], strides = [1, 1]} : vector<5x32xf32> to vector<1x32xf32>
    %97 = vector.broadcast %96 : vector<1x32xf32> to vector<32x32xf32>
    %98 = arith.addf %95, %97 : vector<32x32xf32>
    %99 = math.tanh %98 : vector<32x32xf32>
    %100 = vector.extract_strided_slice %0 {offsets = [3, 0], sizes = [1, 32], strides = [1, 1]} : vector<5x32xf32> to vector<1x32xf32>
    %101 = vector.broadcast %100 : vector<1x32xf32> to vector<32x32xf32>
    %102 = arith.mulf %99, %101 : vector<32x32xf32>
    %cst_38 = arith.constant dense<0.000000e+00> : vector<32xf32>
    %103 = vector.multi_reduction <add>, %102, %cst_38 [1] : vector<32x32xf32> to vector<32xf32>
    %104 = vector.shape_cast %103 : vector<32xf32> to vector<32x1xf32>
    %105 = vector.extract_strided_slice %0 {offsets = [4, 0], sizes = [1, 1], strides = [1, 1]} : vector<5x32xf32> to vector<1x1xf32>
    %106 = vector.broadcast %105 : vector<1x1xf32> to vector<32x1xf32>
    %107 = arith.addf %104, %106 : vector<32x1xf32>
    %108 = vector.shape_cast %107 : vector<32x1xf32> to vector<32x1xf32>
    %109 = vector.broadcast %108 : vector<32x1xf32> to vector<32x128xf32>
    %c0_39 = arith.constant 0 : index
    %c0_40 = arith.constant 0 : index
    %110 = vector.load %arg8[%c0_39, %c0_40] : memref<32x128xf32, #tpu.memory_space<vmem>>, vector<32x128xf32>
    tpu.vector_store %arg8[%c0_39, %c0_40], %109 {strides = array<i32>} : memref<32x128xf32, #tpu.memory_space<vmem>>, vector<32x128xf32>,
    return
  }
  func.func @transform_0(%arg0: i32) -> (i32, i32) {
    %c0_i32 = arith.constant 0 : i32
    %c0_i32_0 = arith.constant 0 : i32
    return %arg0, %c0_i32 : i32, i32
  }
  func.func @transform_1(%arg0: i32) -> (i32, i32) {
    %c0_i32 = arith.constant 0 : i32
    %c0_i32_0 = arith.constant 0 : i32
    return %arg0, %c0_i32 : i32, i32
  }
  func.func @transform_2(%arg0: i32) -> (i32, i32) {
    %c0_i32 = arith.constant 0 : i32
    %c0_i32_0 = arith.constant 0 : i32
    return %arg0, %c0_i32 : i32, i32
  }
  func.func @transform_3(%arg0: i32) -> (i32, i32) {
    %c0_i32 = arith.constant 0 : i32
    %c0_i32_0 = arith.constant 0 : i32
    return %arg0, %c0_i32 : i32, i32
  }
  func.func @transform_4(%arg0: i32) -> (i32, i32, i32) {
    %c0_i32 = arith.constant 0 : i32
    %c0_i32_0 = arith.constant 0 : i32
    %c0_i32_1 = arith.constant 0 : i32
    %c0_i32_2 = arith.constant 0 : i32
    return %c0_i32, %c0_i32_0, %c0_i32_1 : i32, i32, i32
  }
  func.func @transform_5(%arg0: i32) -> (i32, i32, i32) {
    %c0_i32 = arith.constant 0 : i32
    %c0_i32_0 = arith.constant 0 : i32
    %c0_i32_1 = arith.constant 0 : i32
    %c0_i32_2 = arith.constant 0 : i32
    return %c0_i32, %c0_i32_0, %c0_i32_1 : i32, i32, i32
  }
  func.func @transform_6(%arg0: i32) -> (i32, i32) {
    %c0_i32 = arith.constant 0 : i32
    %c0_i32_0 = arith.constant 0 : i32
    %c0_i32_1 = arith.constant 0 : i32
    return %c0_i32, %c0_i32_0 : i32, i32
  }
  func.func @transform_7(%arg0: i32) -> (i32, i32) {
    %c0_i32 = arith.constant 0 : i32
    %c0_i32_0 = arith.constant 0 : i32
    return %arg0, %c0_i32 : i32, i32
  }
}

</mosaic_0001>

<llo_original>
// kernel: custom-call.4
$region0: #{custom-call.4}
  %s0 = inlined_call_operand.vmem [shape: bf16[8,6,2,16], index: 0, kind: output, shape index: {}]

// kernel: custom-call.1
$region0: #{custom-call.1}
  %s0 = inlined_call_operand.vmem [shape: f32[6,2,16], index: 0, kind: output, shape index: {}]

// kernel: custom-call
$region0: #{custom-call}
  %s0 = inlined_call_operand.vmem [shape: bf16[6,2,16], index: 0, kind: output, shape index: {}]

// kernel: multisql_forward.1
$region0: #{multisql_forward.1}
  #allocation0 [shape = 'u32[]', space=smem, size = 0x4, offset = 0x4, fixed_abs, tag = 'smem constant byte address 0x4 - core index']
  #allocation1 [shape = 'u32[144,128]{1,0:T(1,128)}', space=vmem, size = 0x12000, scoped, tag = 'internal scratch']
  %s0 = inlined_call_operand.vmem [shape: bf16[64,32], index: 0, kind: input, shape index: {}]
  %s1 = inlined_call_operand.vmem [shape: bf16[40,32], index: 1, kind: input, shape index: {}]
  %s2 = inlined_call_operand.vmem [shape: bf16[32,32], index: 2, kind: input, shape index: {}]
  %s3 = inlined_call_operand.vmem [shape: s32[32,4], index: 3, kind: input, shape index: {}]
  %s4 = inlined_call_operand.vmem [shape: bf16[2,32,32], index: 4, kind: input, shape index: {}]
  %s5 = inlined_call_operand.vmem [shape: bf16[3,32,32], index: 5, kind: input, shape index: {}]
  %s6 = inlined_call_operand.vmem [shape: f32[5,32], index: 6, kind: input, shape index: {}]
  %s7 = inlined_call_operand.vmem [shape: f32[32,128], index: 7, kind: output, shape index: {}]
  %s8 = sld [smem:[#allocation0]]
  $region38: #{multisql_forward.1} parent=0
    _
  %s10 = ssub.s32 1, %s8
  %s11 = scalar_select 0, %s10, %s8
  // Predicated region
  $region2: #{multisql_forward.1} parent=0 // pred_check
    _
  $region3: #{multisql_forward.1} parent=0 // pred_check_branch
    %13 = sbr.rel (0) target = $region5
  $region4: #{multisql_forward.1} parent=0 // pred_region
    _
  $region5: #{multisql_forward.1} parent=0 // pred_fallthru
    _
  // Predicated region
  $region6: #{multisql_forward.1} parent=0 // pred_check
    _
  $region7: #{multisql_forward.1} parent=0 // pred_check_branch
    %15 = sbr.rel (0) target = $region9
  $region8: #{multisql_forward.1} parent=0 // pred_region
    _
  $region9: #{multisql_forward.1} parent=0 // pred_fallthru
    _
  // Predicated region
  $region10: #{multisql_forward.1} parent=0 // pred_check
    _
  $region11: #{multisql_forward.1} parent=0 // pred_check_branch
    %17 = sbr.rel (0) target = $region13
  $region12: #{multisql_forward.1} parent=0 // pred_region
    _
  $region13: #{multisql_forward.1} parent=0 // pred_fallthru
    _
  // Predicated region
  $region14: #{multisql_forward.1} parent=0 // pred_check
    _
  $region15: #{multisql_forward.1} parent=0 // pred_check_branch
    %19 = sbr.rel (0) target = $region17
  $region16: #{multisql_forward.1} parent=0 // pred_region
    _
  $region17: #{multisql_forward.1} parent=0 // pred_fallthru
    _
  // Predicated region
  $region18: #{multisql_forward.1} parent=0 // pred_check
    _
  $region19: #{multisql_forward.1} parent=0 // pred_check_branch
    %21 = sbr.rel (0) target = $region21
  $region20: #{multisql_forward.1} parent=0 // pred_region
    _
  $region21: #{multisql_forward.1} parent=0 // pred_fallthru
    _
  // Predicated region
  $region22: #{multisql_forward.1} parent=0 // pred_check
    _
  $region23: #{multisql_forward.1} parent=0 // pred_check_branch
    %23 = sbr.rel (0) target = $region25
  $region24: #{multisql_forward.1} parent=0 // pred_region
    _
  $region25: #{multisql_forward.1} parent=0 // pred_fallthru
    _
  // Predicated region
  $region26: #{multisql_forward.1} parent=0 // pred_check
    _
  $region27: #{multisql_forward.1} parent=0 // pred_check_branch
    %25 = sbr.rel (0) target = $region29
  $region28: #{multisql_forward.1} parent=0 // pred_region
    _
  $region29: #{multisql_forward.1} parent=0 // pred_fallthru
    _
  %v27 = vld [vmem:[%s6] sm:$0x1f]
  %v28 = vld [vmem:[%s3] sm:$0xff]
  %v29 = vld [vmem:[%s3 + $0x8] sm:$0xff]
  %v30 = vld [vmem:[%s3 + $0x10] sm:$0xff]
  %v31 = vld [vmem:[%s3 + $0x18] sm:$0xff]
  %v32 = vld [vmem:[%s2] sm:$0xf]
  %v33 = vld [vmem:[%s2 + $0x4] sm:$0xf]
  %v34 = vld [vmem:[%s2 + $0x8] sm:$0xf]
  %v35 = vld [vmem:[%s2 + $0xc] sm:$0xf]
  %v36 = vld [vmem:[%s0] sm:$0xf]
  %v37 = vld [vmem:[%s0 + $0x4] sm:$0xf]
  %v38 = vld [vmem:[%s0 + $0x8] sm:$0xf]
  %v39 = vld [vmem:[%s0 + $0xc] sm:$0xf]
  %v40 = vld [vmem:[%s0 + $0x10] sm:$0xf]
  %v41 = vld [vmem:[%s0 + $0x14] sm:$0xf]
  %v42 = vld [vmem:[%s0 + $0x18] sm:$0xf]
  %v43 = vld [vmem:[%s0 + $0x1c] sm:$0xf]
  %v44 = vld [vmem:[%s4] sm:$0xf]
  %v45 = vld [vmem:[%s4 + $0x4] sm:$0xf]
  %v46 = vld [vmem:[%s4 + $0x8] sm:$0xf]
  %v47 = vld [vmem:[%s4 + $0xc] sm:$0xf]
  %v48 = vlaneseq
  %v49 = vshrl.u32 %v48, 7
  %v50 = vsub.s32 0, %v49
  %v51 = vrot.slane %v27, %v50
  %v60 = vunpack.c.l.b16 %v36
  %v61 = vunpack.c.l.b16 %v37
  %v62 = vunpack.c.l.b16 %v38
  %v63 = vunpack.c.l.b16 %v39
  %v64 = vunpack.c.l.b16 %v40
  %v65 = vunpack.c.l.b16 %v41
  %v66 = vunpack.c.l.b16 %v42
  %v67 = vunpack.c.l.b16 %v43
  %v68 = vpack.c.b16 %v61, %v60
  %v69 = vpack.c.b16 %v63, %v62
  %v70 = vpack.c.b16 %v65, %v64
  %v71 = vpack.c.b16 %v67, %v66
  %v76 = vunpack.c.l.b16 %v44
  %v77 = vunpack.c.l.b16 %v45
  %v78 = vunpack.c.l.b16 %v46
  %v79 = vunpack.c.l.b16 %v47
  %v80 = vpack.c.b16 %v77, %v76
  %v81 = vpack.c.b16 %v79, %v78
  %vm84 = vcmask 261120
  %v86 = vsel %vm84, %v68, 0
  %v89 = vsel %vm84, %v69, 0
  %v92 = vsel %vm84, %v70, 0
  %v95 = vsel %vm84, %v71, 0
  %97 = vmatprep.subr.bf16.mxu0 0
  %98 = vmatpush1.bf16.msra.mxu0 0
  %99 = vmatprep.subr.bf16.mxu0 0
  %100 = vmatpush1.bf16.msra.mxu0 0
  %101 = vmatprep.subr.bf16.mxu0 0
  %102 = vmatpush1.bf16.msra.mxu0 0
  %103 = vmatprep.subr.bf16.mxu0 0
  %104 = vmatpush1.bf16.msra.mxu0 0
  %105 = vmatprep.subr.bf16.mxu0 0
  %106 = vmatpush1.bf16.msra.mxu0 0
  %107 = vmatprep.subr.bf16.mxu0 0
  %108 = vmatpush1.bf16.msra.mxu0 0
  %109 = vmatprep.subr.bf16.mxu0 0
  %110 = vmatpush1.bf16.msra.mxu0 %v81
  %111 = vmatprep.subr.bf16.mxu0 0
  %112 = vmatpush1.bf16.msra.mxu0 %v80
  %113 = vmatprep.subr.bf16.mxu0 0
  %114 = vmatpush2.bf16.msra.mxu0 0
  %115 = vmatprep.subr.bf16.mxu0 0
  %116 = vmatpush2.bf16.msra.mxu0 0
  %117 = vmatprep.subr.bf16.mxu0 0
  %118 = vmatpush2.bf16.msra.mxu0 0
  %119 = vmatprep.subr.bf16.mxu0 0
  %120 = vmatpush2.bf16.msra.mxu0 0
  %121 = vmatprep.subr.bf16.mxu0 0
  %122 = vmatpush2.bf16.msra.mxu0 0
  %123 = vmatprep.subr.bf16.mxu0 0
  %124 = vmatpush2.bf16.msra.mxu0 0
  %125 = vmatprep.subr.bf16.mxu0 0
  %126 = vmatpush2.bf16.msra.mxu0 0
  %127 = vmatprep.subr.bf16.mxu0 0
  %128 = vmatpush2.bf16.msra.mxu0 0
  %129 = vmatprep.mubr.bf16.mxu0 0
  %130 = vmatmul.mubr.bf16.gmra.mxu0 %v86
  %v131 = vpop.f32.mrf.mxu0
  %v132 = vadd.f32 %v51, %v131
  %v133 = vpop.f32.mrf.mxu0
  %v134 = vpop.f32.mrf.mxu0
  %v135 = vadd.f32 %v51, %v134
  %v136 = vpop.f32.mrf.mxu0
  %137 = vmatprep.mubr.bf16.mxu0 0
  %138 = vmatmul.mubr.bf16.gmra.mxu0 %v89
  %v139 = vpop.f32.mrf.mxu0
  %v140 = vadd.f32 %v51, %v139
  %v141 = vpop.f32.mrf.mxu0
  %v142 = vpop.f32.mrf.mxu0
  %v143 = vadd.f32 %v51, %v142
  %v144 = vpop.f32.mrf.mxu0
  %145 = vmatprep.mubr.bf16.mxu0 0
  %146 = vmatmul.mubr.bf16.gmra.mxu0 %v92
  %v147 = vpop.f32.mrf.mxu0
  %v148 = vadd.f32 %v51, %v147
  %v149 = vpop.f32.mrf.mxu0
  %v150 = vpop.f32.mrf.mxu0
  %v151 = vadd.f32 %v51, %v150
  %v152 = vpop.f32.mrf.mxu0
  %153 = vmatprep.mubr.bf16.mxu0 0
  %154 = vmatmul.mubr.bf16.gmra.mxu0 %v95
  %v155 = vpop.f32.mrf.mxu0
  %v156 = vadd.f32 %v51, %v155
  %v157 = vpop.f32.mrf.mxu0
  %v158 = vpop.f32.mrf.mxu0
  %v159 = vadd.f32 %v51, %v158
  %v160 = vpop.f32.mrf.mxu0
  %161 = vdwg.mxu0
  %v162 = vpack.c.bf16 %v135, %v132
  %v163 = vpack.c.bf16 %v143, %v140
  %v164 = vpack.c.bf16 %v151, %v148
  %v165 = vpack.c.bf16 %v159, %v156
  %v170 = vunpack.c.l.b16 %v32
  %v171 = vunpack.c.l.b16 %v33
  %v172 = vunpack.c.l.b16 %v34
  %v173 = vunpack.c.l.b16 %v35
  %v174 = vpack.c.b16 %v171, %v170
  %v175 = vpack.c.b16 %v173, %v172
  %v177 = vsel %vm84, %v174, 0
  %v180 = vsel %vm84, %v175, 0
  %v183 = vsel %vm84, %v162, 0
  %v186 = vsel %vm84, %v163, 0
  %v189 = vsel %vm84, %v164, 0
  %v192 = vsel %vm84, %v165, 0
  %194 = vmatprep.subr.bf16.mxu0 0
  %195 = vmatpush1.bf16.xpose.msra.mxu0 0
  %196 = vmatprep.subr.bf16.mxu0 0
  %197 = vmatpush1.bf16.xpose.msra.mxu0 0
  %198 = vmatprep.subr.bf16.mxu0 0
  %199 = vmatpush1.bf16.xpose.msra.mxu0 0
  %200 = vmatprep.subr.bf16.mxu0 0
  %201 = vmatpush1.bf16.xpose.msra.mxu0 0
  %202 = vmatprep.subr.bf16.mxu0 0
  %203 = vmatpush1.bf16.xpose.msra.mxu0 %v192
  %204 = vmatprep.subr.bf16.mxu0 0
  %205 = vmatpush1.bf16.xpose.msra.mxu0 %v189
  %206 = vmatprep.subr.bf16.mxu0 0
  %207 = vmatpush1.bf16.xpose.msra.mxu0 %v186
  %208 = vmatprep.subr.bf16.mxu0 0
  %209 = vmatpush1.bf16.xpose.msra.mxu0 %v183
  %210 = vmatprep.subr.bf16.mxu0 0
  %211 = vmatpush2.bf16.xpose.msra.mxu0 0
  %212 = vmatprep.subr.bf16.mxu0 0
  %213 = vmatpush2.bf16.xpose.msra.mxu0 0
  %214 = vmatprep.subr.bf16.mxu0 0
  %215 = vmatpush2.bf16.xpose.msra.mxu0 0
  %216 = vmatprep.subr.bf16.mxu0 0
  %217 = vmatpush2.bf16.xpose.msra.mxu0 0
  %218 = vmatprep.subr.bf16.mxu0 0
  %219 = vmatpush2.bf16.xpose.msra.mxu0 0
  %220 = vmatprep.subr.bf16.mxu0 0
  %221 = vmatpush2.bf16.xpose.msra.mxu0 0
  %222 = vmatprep.subr.bf16.mxu0 0
  %223 = vmatpush2.bf16.xpose.msra.mxu0 0
  %224 = vmatprep.subr.bf16.mxu0 0
  %225 = vmatpush2.bf16.xpose.msra.mxu0 0
  %226 = vmatprep.mubr.bf16.mxu0 0
  %227 = vmatmul.mubr.bf16.gmra.mxu0 %v177
  %v228 = vpop.f32.mrf.mxu0
  %v229 = vadd.f32 0.0, %v228
  %v230 = vpop.f32.mrf.mxu0
  %v231 = vpop.f32.mrf.mxu0
  %v232 = vadd.f32 0.0, %v231
  %v233 = vpop.f32.mrf.mxu0
  %234 = vmatprep.mubr.bf16.mxu0 0
  %235 = vmatmul.mubr.bf16.gmra.mxu0 %v180
  %v236 = vpop.f32.mrf.mxu0
  %v237 = vadd.f32 0.0, %v236
  %v238 = vpop.f32.mrf.mxu0
  %v239 = vpop.f32.mrf.mxu0
  %v240 = vadd.f32 0.0, %v239
  %v241 = vpop.f32.mrf.mxu0
  %242 = vdwg.mxu0
  %v243 = vlaneseq
  %v244 = vand.u32 %v243, 127
  %245 = vset.pattern.permute.xlu0 0
  %246 = vperm.xlu0 %245, %v28
  %v247 = vpop.permute.xlu0 %246
  %248 = vset.pattern.permute.xlu0 0
  %249 = vperm.xlu0 %248, %v29
  %v250 = vpop.permute.xlu0 %249
  %251 = vset.pattern.permute.xlu0 0
  %252 = vperm.xlu0 %251, %v30
  %v253 = vpop.permute.xlu0 %252
  %254 = vset.pattern.permute.xlu0 0
  %255 = vperm.xlu0 %254, %v31
  %v256 = vpop.permute.xlu0 %255
  %vm257 = vcmp.ge.s32.totalorder %v244, %v247
  %vm258 = vcmp.ge.s32.totalorder %v244, %v250
  %vm259 = vcmp.ge.s32.totalorder %v244, %v253
  %vm260 = vcmp.ge.s32.totalorder %v244, %v256
  %v261 = vadd.s32 %v28, 8
  %v262 = vadd.s32 %v29, 8
  %v263 = vadd.s32 %v30, 8
  %v264 = vadd.s32 %v31, 8
  %265 = vset.pattern.permute.xlu0 0
  %266 = vperm.xlu0 %265, %v261
  %v267 = vpop.permute.xlu0 %266
  %268 = vset.pattern.permute.xlu0 0
  %269 = vperm.xlu0 %268, %v262
  %v270 = vpop.permute.xlu0 %269
  %271 = vset.pattern.permute.xlu0 0
  %272 = vperm.xlu0 %271, %v263
  %v273 = vpop.permute.xlu0 %272
  %274 = vset.pattern.permute.xlu0 0
  %275 = vperm.xlu0 %274, %v264
  %v276 = vpop.permute.xlu0 %275
  %vm277 = vcmp.lt.s32.totalorder %v244, %v267
  %vm278 = vcmp.lt.s32.totalorder %v244, %v270
  %vm279 = vcmp.lt.s32.totalorder %v244, %v273
  %vm280 = vcmp.lt.s32.totalorder %v244, %v276
  %vm281 = vmand %vm257, %vm277
  %vm282 = vmand %vm258, %vm278
  %vm283 = vmand %vm259, %vm279
  %vm284 = vmand %vm260, %vm280
  %285 = vset.pattern.permute.xlu0 1
  %286 = vperm.xlu0 %285, %v28
  %v287 = vpop.permute.xlu0 %286
  %288 = vset.pattern.permute.xlu0 1
  %289 = vperm.xlu0 %288, %v29
  %v290 = vpop.permute.xlu0 %289
  %291 = vset.pattern.permute.xlu0 1
  %292 = vperm.xlu0 %291, %v30
  %v293 = vpop.permute.xlu0 %292
  %294 = vset.pattern.permute.xlu0 1
  %295 = vperm.xlu0 %294, %v31
  %v296 = vpop.permute.xlu0 %295
  %vm297 = vcmp.lt.s32.totalorder %v244, %v287
  %vm298 = vcmp.lt.s32.totalorder %v244, %v290
  %vm299 = vcmp.lt.s32.totalorder %v244, %v293
  %vm300 = vcmp.lt.s32.totalorder %v244, %v296
  %vm301 = vmand %vm257, %vm297
  %vm302 = vmand %vm258, %vm298
  %vm303 = vmand %vm259, %vm299
  %vm304 = vmand %vm260, %vm300
  %v305 = vsel %vm281, -100.0, -inf
  %v306 = vsel %vm282, -100.0, -inf
  %v307 = vsel %vm283, -100.0, -inf
  %v308 = vsel %vm284, -100.0, -inf
  %v309 = vsel %vm301, %v229, %v305
  %v310 = vsel %vm302, %v232, %v306
  %v311 = vsel %vm303, %v237, %v307
  %v312 = vsel %vm304, %v240, %v308
  %vm313 = vcmask 523264
  %v314 = vsel %vm313, %v309, -inf
  %315 = vmax.xlane.f32.xlu0 %v314
  %v316 = vpop.xlane.xlu0 %315
  %v317 = vsel %vm313, %v310, -inf
  %318 = vmax.xlane.f32.xlu0 %v317
  %v319 = vpop.xlane.xlu0 %318
  %v320 = vsel %vm313, %v311, -inf
  %321 = vmax.xlane.f32.xlu0 %v320
  %v322 = vpop.xlane.xlu0 %321
  %v323 = vsel %vm313, %v312, -inf
  %324 = vmax.xlane.f32.xlu0 %v323
  %v325 = vpop.xlane.xlu0 %324
  %v326 = vsub.f32 %v309, %v316
  %v327 = vsub.f32 %v310, %v319
  %v328 = vsub.f32 %v311, %v322
  %v329 = vsub.f32 %v312, %v325
  %v330 = vmul.f32 %v326, 1.442695
  %v331 = vpow.pop %v330
  %v332 = vmul.f32 %v327, 1.442695
  %v333 = vpow.pop %v332
  %v334 = vmul.f32 %v328, 1.442695
  %v335 = vpow.pop %v334
  %v336 = vmul.f32 %v329, 1.442695
  %v337 = vpow.pop %v336
  %v338 = vsel %vm313, %v331, 0.0
  %339 = vadd.xlane.f32.xlu0 %v338
  %v340 = vpop.xlane.xlu0 %339
  %v341 = vsel %vm313, %v333, 0.0
  %342 = vadd.xlane.f32.xlu0 %v341
  %v343 = vpop.xlane.xlu0 %342
  %v344 = vsel %vm313, %v335, 0.0
  %345 = vadd.xlane.f32.xlu0 %v344
  %v346 = vpop.xlane.xlu0 %345
  %v347 = vsel %vm313, %v337, 0.0
  %348 = vadd.xlane.f32.xlu0 %v347
  %v349 = vpop.xlane.xlu0 %348
  %v350 = vrcp.pop %v340
  %v351 = vrcp.pop %v343
  %v352 = vrcp.pop %v346
  %v353 = vrcp.pop %v349
  %v354 = vmul.f32 %v331, %v350
  %v355 = vmul.f32 %v333, %v351
  %v356 = vmul.f32 %v335, %v352
  %v357 = vmul.f32 %v337, %v353
  %v358 = vpack.c.bf16 %v355, %v354
  %v359 = vpack.c.bf16 %v357, %v356
  %v365 = vsel %vm313, %v358, 0
  %v368 = vsel %vm313, %v359, 0
  %370 = vmatprep.subr.bf16.mxu0 0
  %371 = vmatpush1.bf16.msra.mxu0 0
  %372 = vmatprep.subr.bf16.mxu0 0
  %373 = vmatpush1.bf16.msra.mxu0 0
  %374 = vmatprep.subr.bf16.mxu0 0
  %375 = vmatpush1.bf16.msra.mxu0 0
  %376 = vmatprep.subr.bf16.mxu0 0
  %377 = vmatpush1.bf16.msra.mxu0 0
  %378 = vmatprep.subr.bf16.mxu0 0
  %379 = vmatpush1.bf16.msra.mxu0 %v71
  %380 = vmatprep.subr.bf16.mxu0 0
  %381 = vmatpush1.bf16.msra.mxu0 %v70
  %382 = vmatprep.subr.bf16.mxu0 0
  %383 = vmatpush1.bf16.msra.mxu0 %v69
  %384 = vmatprep.subr.bf16.mxu0 0
  %385 = vmatpush1.bf16.msra.mxu0 %v68
  %386 = vmatprep.subr.bf16.mxu0 0
  %387 = vmatpush2.bf16.msra.mxu0 0
  %388 = vmatprep.subr.bf16.mxu0 0
  %389 = vmatpush2.bf16.msra.mxu0 0
  %390 = vmatprep.subr.bf16.mxu0 0
  %391 = vmatpush2.bf16.msra.mxu0 0
  %392 = vmatprep.subr.bf16.mxu0 0
  %393 = vmatpush2.bf16.msra.mxu0 0
  %394 = vmatprep.subr.bf16.mxu0 0
  %395 = vmatpush2.bf16.msra.mxu0 0
  %396 = vmatprep.subr.bf16.mxu0 0
  %397 = vmatpush2.bf16.msra.mxu0 0
  %398 = vmatprep.subr.bf16.mxu0 0
  %399 = vmatpush2.bf16.msra.mxu0 0
  %400 = vmatprep.subr.bf16.mxu0 0
  %401 = vmatpush2.bf16.msra.mxu0 0
  %402 = vmatprep.mubr.bf16.mxu0 0
  %403 = vmatmul.mubr.bf16.gmra.mxu0 %v365
  %v404 = vpop.f32.mrf.mxu0
  %v405 = vadd.f32 0.0, %v404
  %v406 = vpop.f32.mrf.mxu0
  %v407 = vpop.f32.mrf.mxu0
  %v408 = vadd.f32 0.0, %v407
  %v409 = vpop.f32.mrf.mxu0
  %410 = vmatprep.mubr.bf16.mxu0 0
  %411 = vmatmul.mubr.bf16.gmra.mxu0 %v368
  %v412 = vpop.f32.mrf.mxu0
  %v413 = vadd.f32 0.0, %v412
  %v414 = vpop.f32.mrf.mxu0
  %v415 = vpop.f32.mrf.mxu0
  %v416 = vadd.f32 0.0, %v415
  %v417 = vpop.f32.mrf.mxu0
  %418 = vdwg.mxu0
  %v419 = vpack.c.bf16 %v408, %v405
  %v420 = vpack.c.bf16 %v416, %v413
  %v421 = vld [vmem:[%s5] sm:$0xf]
  %v422 = vld [vmem:[%s5 + $0x4] sm:$0xf]
  %v423 = vld [vmem:[%s5 + $0x8] sm:$0xf]
  %v424 = vld [vmem:[%s5 + $0xc] sm:$0xf]
  %v425 = vld [vmem:[%s1] sm:$0xf]
  %v426 = vld [vmem:[%s1 + $0x4] sm:$0xf]
  %v427 = vld [vmem:[%s1 + $0x8] sm:$0xf]
  %v428 = vld [vmem:[%s1 + $0xc] sm:$0xf]
  %v429 = vld [vmem:[%s1 + $0x10] sm:$0xf]
  %s430 = scalar_lea.vmem %s4, 16
  %v431 = vld [vmem:[%s430] sm:$0xf]
  %v432 = vld [vmem:[%s430 + $0x4] sm:$0xf]
  %v433 = vld [vmem:[%s430 + $0x8] sm:$0xf]
  %v434 = vld [vmem:[%s430 + $0xc] sm:$0xf]
  %v435 = vlaneseq
  %v436 = vshrl.u32 %v435, 7
  %v437 = vsub.s32 1, %v436
  %v438 = vrot.slane %v27, %v437
  %v444 = vunpack.c.l.b16 %v425
  %v445 = vunpack.c.l.b16 %v426
  %v446 = vunpack.c.l.b16 %v427
  %v447 = vunpack.c.l.b16 %v428
  %v448 = vunpack.c.l.b16 %v429
  %v449 = vpack.c.b16 %v445, %v444
  %v450 = vpack.c.b16 %v447, %v446
  %v451 = vpack.c.b16 %v448, %v448
  %v456 = vunpack.c.l.b16 %v431
  %v457 = vunpack.c.l.b16 %v432
  %v458 = vunpack.c.l.b16 %v433
  %v459 = vunpack.c.l.b16 %v434
  %v460 = vpack.c.b16 %v457, %v456
  %v461 = vpack.c.b16 %v459, %v458
  %v465 = vsel %vm84, %v449, 0
  %v468 = vsel %vm84, %v450, 0
  %v471 = vsel %vm84, %v451, 0
  %473 = vmatprep.subr.bf16.mxu0 0
  %474 = vmatpush1.bf16.msra.mxu0 0
  %475 = vmatprep.subr.bf16.mxu0 0
  %476 = vmatpush1.bf16.msra.mxu0 0
  %477 = vmatprep.subr.bf16.mxu0 0
  %478 = vmatpush1.bf16.msra.mxu0 0
  %479 = vmatprep.subr.bf16.mxu0 0
  %480 = vmatpush1.bf16.msra.mxu0 0
  %481 = vmatprep.subr.bf16.mxu0 0
  %482 = vmatpush1.bf16.msra.mxu0 0
  %483 = vmatprep.subr.bf16.mxu0 0
  %484 = vmatpush1.bf16.msra.mxu0 0
  %485 = vmatprep.subr.bf16.mxu0 0
  %486 = vmatpush1.bf16.msra.mxu0 %v461
  %487 = vmatprep.subr.bf16.mxu0 0
  %488 = vmatpush1.bf16.msra.mxu0 %v460
  %489 = vmatprep.subr.bf16.mxu0 0
  %490 = vmatpush2.bf16.msra.mxu0 0
  %491 = vmatprep.subr.bf16.mxu0 0
  %492 = vmatpush2.bf16.msra.mxu0 0
  %493 = vmatprep.subr.bf16.mxu0 0
  %494 = vmatpush2.bf16.msra.mxu0 0
  %495 = vmatprep.subr.bf16.mxu0 0
  %496 = vmatpush2.bf16.msra.mxu0 0
  %497 = vmatprep.subr.bf16.mxu0 0
  %498 = vmatpush2.bf16.msra.mxu0 0
  %499 = vmatprep.subr.bf16.mxu0 0
  %500 = vmatpush2.bf16.msra.mxu0 0
  %501 = vmatprep.subr.bf16.mxu0 0
  %502 = vmatpush2.bf16.msra.mxu0 0
  %503 = vmatprep.subr.bf16.mxu0 0
  %504 = vmatpush2.bf16.msra.mxu0 0
  %505 = vmatprep.mubr.bf16.mxu0 0
  %506 = vmatmul.mubr.bf16.gmra.mxu0 %v465
  %v507 = vpop.f32.mrf.mxu0
  %v508 = vadd.f32 %v438, %v507
  %v509 = vpop.f32.mrf.mxu0
  %v510 = vpop.f32.mrf.mxu0
  %v511 = vadd.f32 %v438, %v510
  %v512 = vpop.f32.mrf.mxu0
  %513 = vmatprep.mubr.bf16.mxu0 0
  %514 = vmatmul.mubr.bf16.gmra.mxu0 %v468
  %v515 = vpop.f32.mrf.mxu0
  %v516 = vadd.f32 %v438, %v515
  %v517 = vpop.f32.mrf.mxu0
  %v518 = vpop.f32.mrf.mxu0
  %v519 = vadd.f32 %v438, %v518
  %v520 = vpop.f32.mrf.mxu0
  %521 = vmatprep.mubr.bf16.mxu0 0
  %522 = vmatmul.mubr.bf16.gmra.mxu0 %v471
  %v523 = vpop.f32.mrf.mxu0
  %v524 = vadd.f32 %v438, %v523
  %v525 = vpop.f32.mrf.mxu0
  %v526 = vpop.f32.mrf.mxu0
  %v527 = vpop.f32.mrf.mxu0
  %528 = vdwg.mxu0
  %v529 = vpack.c.bf16 %v511, %v508
  %v530 = vpack.c.bf16 %v519, %v516
  %v531 = vpack.c.bf16 %v524, %v524
  %v533 = vsel %vm84, %v529, 0
  %v536 = vsel %vm84, %v530, 0
  %v539 = vsel %vm84, %v531, 0
  %541 = vmatprep.subr.bf16.mxu0 0
  %542 = vmatpush1.bf16.xpose.msra.mxu0 0
  %543 = vmatprep.subr.bf16.mxu0 0
  %544 = vmatpush1.bf16.xpose.msra.mxu0 0
  %545 = vmatprep.subr.bf16.mxu0 0
  %546 = vmatpush1.bf16.xpose.msra.mxu0 0
  %547 = vmatprep.subr.bf16.mxu0 0
  %548 = vmatpush1.bf16.xpose.msra.mxu0 0
  %549 = vmatprep.subr.bf16.mxu0 0
  %550 = vmatpush1.bf16.xpose.msra.mxu0 0
  %551 = vmatprep.subr.bf16.mxu0 0
  %552 = vmatpush1.bf16.xpose.msra.mxu0 %v539
  %553 = vmatprep.subr.bf16.mxu0 0
  %554 = vmatpush1.bf16.xpose.msra.mxu0 %v536
  %555 = vmatprep.subr.bf16.mxu0 0
  %556 = vmatpush1.bf16.xpose.msra.mxu0 %v533
  %557 = vmatprep.subr.bf16.mxu0 0
  %558 = vmatpush2.bf16.xpose.msra.mxu0 0
  %559 = vmatprep.subr.bf16.mxu0 0
  %560 = vmatpush2.bf16.xpose.msra.mxu0 0
  %561 = vmatprep.subr.bf16.mxu0 0
  %562 = vmatpush2.bf16.xpose.msra.mxu0 0
  %563 = vmatprep.subr.bf16.mxu0 0
  %564 = vmatpush2.bf16.xpose.msra.mxu0 0
  %565 = vmatprep.subr.bf16.mxu0 0
  %566 = vmatpush2.bf16.xpose.msra.mxu0 0
  %567 = vmatprep.subr.bf16.mxu0 0
  %568 = vmatpush2.bf16.xpose.msra.mxu0 0
  %569 = vmatprep.subr.bf16.mxu0 0
  %570 = vmatpush2.bf16.xpose.msra.mxu0 0
  %571 = vmatprep.subr.bf16.mxu0 0
  %572 = vmatpush2.bf16.xpose.msra.mxu0 0
  %573 = vmatprep.mubr.bf16.mxu0 0
  %574 = vmatmul.mubr.bf16.gmra.mxu0 %v177
  %v575 = vpop.f32.mrf.mxu0
  %v576 = vadd.f32 0.0, %v575
  %v577 = vpop.f32.mrf.mxu0
  %v578 = vpop.f32.mrf.mxu0
  %v579 = vadd.f32 0.0, %v578
  %v580 = vpop.f32.mrf.mxu0
  %581 = vmatprep.mubr.bf16.mxu0 0
  %582 = vmatmul.mubr.bf16.gmra.mxu0 %v180
  %v583 = vpop.f32.mrf.mxu0
  %v584 = vadd.f32 0.0, %v583
  %v585 = vpop.f32.mrf.mxu0
  %v586 = vpop.f32.mrf.mxu0
  %v587 = vadd.f32 0.0, %v586
  %v588 = vpop.f32.mrf.mxu0
  %589 = vdwg.mxu0
  %590 = vset.pattern.permute.xlu0 2
  %591 = vperm.xlu0 %590, %v28
  %v592 = vpop.permute.xlu0 %591
  %593 = vset.pattern.permute.xlu0 2
  %594 = vperm.xlu0 %593, %v29
  %v595 = vpop.permute.xlu0 %594
  %596 = vset.pattern.permute.xlu0 2
  %597 = vperm.xlu0 %596, %v30
  %v598 = vpop.permute.xlu0 %597
  %599 = vset.pattern.permute.xlu0 2
  %600 = vperm.xlu0 %599, %v31
  %v601 = vpop.permute.xlu0 %600
  %vm602 = vcmp.ge.s32.totalorder %v244, %v592
  %vm603 = vcmp.ge.s32.totalorder %v244, %v595
  %vm604 = vcmp.ge.s32.totalorder %v244, %v598
  %vm605 = vcmp.ge.s32.totalorder %v244, %v601
  %v606 = vadd.s32 %v28, 5
  %v607 = vadd.s32 %v29, 5
  %v608 = vadd.s32 %v30, 5
  %v609 = vadd.s32 %v31, 5
  %610 = vset.pattern.permute.xlu0 2
  %611 = vperm.xlu0 %610, %v606
  %v612 = vpop.permute.xlu0 %611
  %613 = vset.pattern.permute.xlu0 2
  %614 = vperm.xlu0 %613, %v607
  %v615 = vpop.permute.xlu0 %614
  %616 = vset.pattern.permute.xlu0 2
  %617 = vperm.xlu0 %616, %v608
  %v618 = vpop.permute.xlu0 %617
  %619 = vset.pattern.permute.xlu0 2
  %620 = vperm.xlu0 %619, %v609
  %v621 = vpop.permute.xlu0 %620
  %vm622 = vcmp.lt.s32.totalorder %v244, %v612
  %vm623 = vcmp.lt.s32.totalorder %v244, %v615
  %vm624 = vcmp.lt.s32.totalorder %v244, %v618
  %vm625 = vcmp.lt.s32.totalorder %v244, %v621
  %vm626 = vmand %vm602, %vm622
  %vm627 = vmand %vm603, %vm623
  %vm628 = vmand %vm604, %vm624
  %vm629 = vmand %vm605, %vm625
  %630 = vset.pattern.permute.xlu0 3
  %631 = vperm.xlu0 %630, %v28
  %v632 = vpop.permute.xlu0 %631
  %633 = vset.pattern.permute.xlu0 3
  %634 = vperm.xlu0 %633, %v29
  %v635 = vpop.permute.xlu0 %634
  %636 = vset.pattern.permute.xlu0 3
  %637 = vperm.xlu0 %636, %v30
  %v638 = vpop.permute.xlu0 %637
  %639 = vset.pattern.permute.xlu0 3
  %640 = vperm.xlu0 %639, %v31
  %v641 = vpop.permute.xlu0 %640
  %vm642 = vcmp.lt.s32.totalorder %v244, %v632
  %vm643 = vcmp.lt.s32.totalorder %v244, %v635
  %vm644 = vcmp.lt.s32.totalorder %v244, %v638
  %vm645 = vcmp.lt.s32.totalorder %v244, %v641
  %vm646 = vmand %vm602, %vm642
  %vm647 = vmand %vm603, %vm643
  %vm648 = vmand %vm604, %vm644
  %vm649 = vmand %vm605, %vm645
  %v650 = vsel %vm626, -100.0, -inf
  %v651 = vsel %vm627, -100.0, -inf
  %v652 = vsel %vm628, -100.0, -inf
  %v653 = vsel %vm629, -100.0, -inf
  %v654 = vsel %vm646, %v576, %v650
  %v655 = vsel %vm647, %v579, %v651
  %v656 = vsel %vm648, %v584, %v652
  %v657 = vsel %vm649, %v587, %v653
  %vm658 = vcmask 326656
  %v659 = vsel %vm658, %v654, -inf
  %660 = vmax.xlane.f32.xlu0 %v659
  %v661 = vpop.xlane.xlu0 %660
  %v662 = vsel %vm658, %v655, -inf
  %663 = vmax.xlane.f32.xlu0 %v662
  %v664 = vpop.xlane.xlu0 %663
  %v665 = vsel %vm658, %v656, -inf
  %666 = vmax.xlane.f32.xlu0 %v665
  %v667 = vpop.xlane.xlu0 %666
  %v668 = vsel %vm658, %v657, -inf
  %669 = vmax.xlane.f32.xlu0 %v668
  %v670 = vpop.xlane.xlu0 %669
  %v671 = vsub.f32 %v654, %v661
  %v672 = vsub.f32 %v655, %v664
  %v673 = vsub.f32 %v656, %v667
  %v674 = vsub.f32 %v657, %v670
  %v675 = vmul.f32 %v671, 1.442695
  %v676 = vpow.pop %v675
  %v677 = vmul.f32 %v672, 1.442695
  %v678 = vpow.pop %v677
  %v679 = vmul.f32 %v673, 1.442695
  %v680 = vpow.pop %v679
  %v681 = vmul.f32 %v674, 1.442695
  %v682 = vpow.pop %v681
  %v683 = vsel %vm658, %v676, 0.0
  %684 = vadd.xlane.f32.xlu0 %v683
  %v685 = vpop.xlane.xlu0 %684
  %v686 = vsel %vm658, %v678, 0.0
  %687 = vadd.xlane.f32.xlu0 %v686
  %v688 = vpop.xlane.xlu0 %687
  %v689 = vsel %vm658, %v680, 0.0
  %690 = vadd.xlane.f32.xlu0 %v689
  %v691 = vpop.xlane.xlu0 %690
  %v692 = vsel %vm658, %v682, 0.0
  %693 = vadd.xlane.f32.xlu0 %v692
  %v694 = vpop.xlane.xlu0 %693
  %v695 = vrcp.pop %v685
  %v696 = vrcp.pop %v688
  %v697 = vrcp.pop %v691
  %v698 = vrcp.pop %v694
  %v699 = vmul.f32 %v676, %v695
  %v700 = vmul.f32 %v678, %v696
  %v701 = vmul.f32 %v680, %v697
  %v702 = vmul.f32 %v682, %v698
  %v703 = vpack.c.bf16 %v700, %v699
  %v704 = vpack.c.bf16 %v702, %v701
  %v708 = vsel %vm658, %v703, 0
  %v711 = vsel %vm658, %v704, 0
  %vm713 = vcmask 1043456
  %v714 = vsel %vm713, %v451, 0
  %716 = vmatprep.subr.bf16.mxu0 0
  %717 = vmatpush1.bf16.msra.mxu0 0
  %718 = vmatprep.subr.bf16.mxu0 0
  %719 = vmatpush1.bf16.msra.mxu0 0
  %720 = vmatprep.subr.bf16.mxu0 0
  %721 = vmatpush1.bf16.msra.mxu0 0
  %722 = vmatprep.subr.bf16.mxu0 0
  %723 = vmatpush1.bf16.msra.mxu0 0
  %724 = vmatprep.subr.bf16.mxu0 0
  %725 = vmatpush1.bf16.msra.mxu0 0
  %726 = vmatprep.subr.bf16.mxu0 0
  %727 = vmatpush1.bf16.msra.mxu0 %v714
  %728 = vmatprep.subr.bf16.mxu0 0
  %729 = vmatpush1.bf16.msra.mxu0 %v450
  %730 = vmatprep.subr.bf16.mxu0 0
  %731 = vmatpush1.bf16.msra.mxu0 %v449
  %732 = vmatprep.subr.bf16.mxu0 0
  %733 = vmatpush2.bf16.msra.mxu0 0
  %734 = vmatprep.subr.bf16.mxu0 0
  %735 = vmatpush2.bf16.msra.mxu0 0
  %736 = vmatprep.subr.bf16.mxu0 0
  %737 = vmatpush2.bf16.msra.mxu0 0
  %738 = vmatprep.subr.bf16.mxu0 0
  %739 = vmatpush2.bf16.msra.mxu0 0
  %740 = vmatprep.subr.bf16.mxu0 0
  %741 = vmatpush2.bf16.msra.mxu0 0
  %742 = vmatprep.subr.bf16.mxu0 0
  %743 = vmatpush2.bf16.msra.mxu0 0
  %744 = vmatprep.subr.bf16.mxu0 0
  %745 = vmatpush2.bf16.msra.mxu0 0
  %746 = vmatprep.subr.bf16.mxu0 0
  %747 = vmatpush2.bf16.msra.mxu0 0
  %748 = vmatprep.mubr.bf16.mxu0 0
  %749 = vmatmul.mubr.bf16.gmra.mxu0 %v708
  %v750 = vpop.f32.mrf.mxu0
  %v751 = vadd.f32 0.0, %v750
  %v752 = vpop.f32.mrf.mxu0
  %v753 = vpop.f32.mrf.mxu0
  %v754 = vadd.f32 0.0, %v753
  %v755 = vpop.f32.mrf.mxu0
  %756 = vmatprep.mubr.bf16.mxu0 0
  %757 = vmatmul.mubr.bf16.gmra.mxu0 %v711
  %v758 = vpop.f32.mrf.mxu0
  %v759 = vadd.f32 0.0, %v758
  %v760 = vpop.f32.mrf.mxu0
  %v761 = vpop.f32.mrf.mxu0
  %v762 = vadd.f32 0.0, %v761
  %v763 = vpop.f32.mrf.mxu0
  %764 = vdwg.mxu0
  %v765 = vpack.c.bf16 %v754, %v751
  %v766 = vpack.c.bf16 %v762, %v759
  %s767 = scalar_lea.vmem %s5, 16
  %v768 = vld [vmem:[%s767] sm:$0xf]
  %v769 = vld [vmem:[%s767 + $0x4] sm:$0xf]
  %v770 = vld [vmem:[%s767 + $0x8] sm:$0xf]
  %v771 = vld [vmem:[%s767 + $0xc] sm:$0xf]
  %v776 = vunpack.c.l.b16 %v768
  %v777 = vunpack.c.l.b16 %v769
  %v778 = vunpack.c.l.b16 %v770
  %v779 = vunpack.c.l.b16 %v771
  %v780 = vpack.c.b16 %v777, %v776
  %v781 = vpack.c.b16 %v779, %v778
  %v785 = vsel %vm84, %v765, 0
  %v788 = vsel %vm84, %v766, 0
  %790 = vmatprep.subr.bf16.mxu0 0
  %791 = vmatpush1.bf16.msra.mxu0 0
  %792 = vmatprep.subr.bf16.mxu0 0
  %793 = vmatpush1.bf16.msra.mxu0 0
  %794 = vmatprep.subr.bf16.mxu0 0
  %795 = vmatpush1.bf16.msra.mxu0 0
  %796 = vmatprep.subr.bf16.mxu0 0
  %797 = vmatpush1.bf16.msra.mxu0 0
  %798 = vmatprep.subr.bf16.mxu0 0
  %799 = vmatpush1.bf16.msra.mxu0 0
  %800 = vmatprep.subr.bf16.mxu0 0
  %801 = vmatpush1.bf16.msra.mxu0 0
  %802 = vmatprep.subr.bf16.mxu0 0
  %803 = vmatpush1.bf16.msra.mxu0 %v781
  %804 = vmatprep.subr.bf16.mxu0 0
  %805 = vmatpush1.bf16.msra.mxu0 %v780
  %806 = vmatprep.subr.bf16.mxu0 0
  %807 = vmatpush2.bf16.msra.mxu0 0
  %808 = vmatprep.subr.bf16.mxu0 0
  %809 = vmatpush2.bf16.msra.mxu0 0
  %810 = vmatprep.subr.bf16.mxu0 0
  %811 = vmatpush2.bf16.msra.mxu0 0
  %812 = vmatprep.subr.bf16.mxu0 0
  %813 = vmatpush2.bf16.msra.mxu0 0
  %814 = vmatprep.subr.bf16.mxu0 0
  %815 = vmatpush2.bf16.msra.mxu0 0
  %816 = vmatprep.subr.bf16.mxu0 0
  %817 = vmatpush2.bf16.msra.mxu0 0
  %818 = vmatprep.subr.bf16.mxu0 0
  %819 = vmatpush2.bf16.msra.mxu0 0
  %820 = vmatprep.subr.bf16.mxu0 0
  %821 = vmatpush2.bf16.msra.mxu0 0
  %822 = vmatprep.mubr.bf16.mxu0 0
  %823 = vmatmul.mubr.bf16.gmra.mxu0 %v785
  %v824 = vpop.f32.mrf.mxu0
  %v825 = vadd.f32 0.0, %v824
  %v826 = vpop.f32.mrf.mxu0
  %v827 = vpop.f32.mrf.mxu0
  %v828 = vadd.f32 0.0, %v827
  %v829 = vpop.f32.mrf.mxu0
  %830 = vmatprep.mubr.bf16.mxu0 0
  %831 = vmatmul.mubr.bf16.gmra.mxu0 %v788
  %v832 = vpop.f32.mrf.mxu0
  %v833 = vadd.f32 0.0, %v832
  %v834 = vpop.f32.mrf.mxu0
  %v835 = vpop.f32.mrf.mxu0
  %v836 = vadd.f32 0.0, %v835
  %v837 = vpop.f32.mrf.mxu0
  %838 = vdwg.mxu0
  %v843 = vunpack.c.l.b16 %v421
  %v844 = vunpack.c.l.b16 %v422
  %v845 = vunpack.c.l.b16 %v423
  %v846 = vunpack.c.l.b16 %v424
  %v847 = vpack.c.b16 %v844, %v843
  %v848 = vpack.c.b16 %v846, %v845
  %v852 = vsel %vm84, %v419, 0
  %v855 = vsel %vm84, %v420, 0
  %857 = vmatprep.subr.bf16.mxu0 0
  %858 = vmatpush1.bf16.msra.mxu0 0
  %859 = vmatprep.subr.bf16.mxu0 0
  %860 = vmatpush1.bf16.msra.mxu0 0
  %861 = vmatprep.subr.bf16.mxu0 0
  %862 = vmatpush1.bf16.msra.mxu0 0
  %863 = vmatprep.subr.bf16.mxu0 0
  %864 = vmatpush1.bf16.msra.mxu0 0
  %865 = vmatprep.subr.bf16.mxu0 0
  %866 = vmatpush1.bf16.msra.mxu0 0
  %867 = vmatprep.subr.bf16.mxu0 0
  %868 = vmatpush1.bf16.msra.mxu0 0
  %869 = vmatprep.subr.bf16.mxu0 0
  %870 = vmatpush1.bf16.msra.mxu0 %v848
  %871 = vmatprep.subr.bf16.mxu0 0
  %872 = vmatpush1.bf16.msra.mxu0 %v847
  %873 = vmatprep.subr.bf16.mxu0 0
  %874 = vmatpush2.bf16.msra.mxu0 0
  %875 = vmatprep.subr.bf16.mxu0 0
  %876 = vmatpush2.bf16.msra.mxu0 0
  %877 = vmatprep.subr.bf16.mxu0 0
  %878 = vmatpush2.bf16.msra.mxu0 0
  %879 = vmatprep.subr.bf16.mxu0 0
  %880 = vmatpush2.bf16.msra.mxu0 0
  %881 = vmatprep.subr.bf16.mxu0 0
  %882 = vmatpush2.bf16.msra.mxu0 0
  %883 = vmatprep.subr.bf16.mxu0 0
  %884 = vmatpush2.bf16.msra.mxu0 0
  %885 = vmatprep.subr.bf16.mxu0 0
  %886 = vmatpush2.bf16.msra.mxu0 0
  %887 = vmatprep.subr.bf16.mxu0 0
  %888 = vmatpush2.bf16.msra.mxu0 0
  %889 = vmatprep.mubr.bf16.mxu0 0
  %890 = vmatmul.mubr.bf16.gmra.mxu0 %v852
  %v891 = vpop.f32.mrf.mxu0
  %v892 = vadd.f32 %v825, %v891
  %v893 = vpop.f32.mrf.mxu0
  %v894 = vpop.f32.mrf.mxu0
  %v895 = vadd.f32 %v828, %v894
  %v896 = vpop.f32.mrf.mxu0
  %897 = vmatprep.mubr.bf16.mxu0 0
  %898 = vmatmul.mubr.bf16.gmra.mxu0 %v855
  %v899 = vpop.f32.mrf.mxu0
  %v900 = vadd.f32 %v833, %v899
  %v901 = vpop.f32.mrf.mxu0
  %v902 = vpop.f32.mrf.mxu0
  %v903 = vadd.f32 %v836, %v902
  %v904 = vpop.f32.mrf.mxu0
  %905 = vdwg.mxu0
  %s906 = scalar_lea.vmem %s5, 32
  %v907 = vld [vmem:[%s906] sm:$0xf]
  %v908 = vld [vmem:[%s906 + $0x4] sm:$0xf]
  %v909 = vld [vmem:[%s906 + $0x8] sm:$0xf]
  %v910 = vld [vmem:[%s906 + $0xc] sm:$0xf]
  %v915 = vunpack.c.l.b16 %v907
  %v916 = vunpack.c.l.b16 %v908
  %v917 = vunpack.c.l.b16 %v909
  %v918 = vunpack.c.l.b16 %v910
  %v919 = vpack.c.b16 %v916, %v915
  %v920 = vpack.c.b16 %v918, %v917
  %923 = vmatprep.subr.bf16.mxu0 0
  %924 = vmatpush1.bf16.msra.mxu0 0
  %925 = vmatprep.subr.bf16.mxu0 0
  %926 = vmatpush1.bf16.msra.mxu0 0
  %927 = vmatprep.subr.bf16.mxu0 0
  %928 = vmatpush1.bf16.msra.mxu0 0
  %929 = vmatprep.subr.bf16.mxu0 0
  %930 = vmatpush1.bf16.msra.mxu0 0
  %931 = vmatprep.subr.bf16.mxu0 0
  %932 = vmatpush1.bf16.msra.mxu0 0
  %933 = vmatprep.subr.bf16.mxu0 0
  %934 = vmatpush1.bf16.msra.mxu0 0
  %935 = vmatprep.subr.bf16.mxu0 0
  %936 = vmatpush1.bf16.msra.mxu0 %v920
  %937 = vmatprep.subr.bf16.mxu0 0
  %938 = vmatpush1.bf16.msra.mxu0 %v919
  %939 = vmatprep.subr.bf16.mxu0 0
  %940 = vmatpush2.bf16.msra.mxu0 0
  %941 = vmatprep.subr.bf16.mxu0 0
  %942 = vmatpush2.bf16.msra.mxu0 0
  %943 = vmatprep.subr.bf16.mxu0 0
  %944 = vmatpush2.bf16.msra.mxu0 0
  %945 = vmatprep.subr.bf16.mxu0 0
  %946 = vmatpush2.bf16.msra.mxu0 0
  %947 = vmatprep.subr.bf16.mxu0 0
  %948 = vmatpush2.bf16.msra.mxu0 0
  %949 = vmatprep.subr.bf16.mxu0 0
  %950 = vmatpush2.bf16.msra.mxu0 0
  %951 = vmatprep.subr.bf16.mxu0 0
  %952 = vmatpush2.bf16.msra.mxu0 0
  %953 = vmatprep.subr.bf16.mxu0 0
  %954 = vmatpush2.bf16.msra.mxu0 0
  %955 = vmatprep.mubr.bf16.mxu0 0
  %956 = vmatmul.mubr.bf16.gmra.mxu0 %v177
  %v957 = vpop.f32.mrf.mxu0
  %v958 = vadd.f32 0.0, %v957
  %v959 = vpop.f32.mrf.mxu0
  %v960 = vpop.f32.mrf.mxu0
  %v961 = vadd.f32 0.0, %v960
  %v962 = vpop.f32.mrf.mxu0
  %963 = vmatprep.mubr.bf16.mxu0 0
  %964 = vmatmul.mubr.bf16.gmra.mxu0 %v180
  %v965 = vpop.f32.mrf.mxu0
  %v966 = vadd.f32 0.0, %v965
  %v967 = vpop.f32.mrf.mxu0
  %v968 = vpop.f32.mrf.mxu0
  %v969 = vadd.f32 0.0, %v968
  %v970 = vpop.f32.mrf.mxu0
  %971 = vdwg.mxu0
  %v972 = vadd.f32 %v892, %v958
  %v973 = vadd.f32 %v895, %v961
  %v974 = vadd.f32 %v900, %v966
  %v975 = vadd.f32 %v903, %v969
  %v976 = vlaneseq
  %v977 = vshrl.u32 %v976, 7
  %v978 = vsub.s32 2, %v977
  %v979 = vrot.slane %v27, %v978
  %v980 = vadd.f32 %v972, %v979
  %v981 = vadd.f32 %v973, %v979
  %v982 = vadd.f32 %v974, %v979
  %v983 = vadd.f32 %v975, %v979
  %v984 = vtanh.pop %v980
  %v985 = vtanh.pop %v981
  %v986 = vtanh.pop %v982
  %v987 = vtanh.pop %v983
  %v988 = vlaneseq
  %v989 = vshrl.u32 %v988, 7
  %v990 = vsub.s32 3, %v989
  %v991 = vrot.slane %v27, %v990
  %v992 = vmul.f32 %v984, %v991
  %v993 = vmul.f32 %v985, %v991
  %v994 = vmul.f32 %v986, %v991
  %v995 = vmul.f32 %v987, %v991
  %v996 = vsel %vm84, %v992, 0.0
  %997 = vadd.xlane.f32.xlu0 %v996
  %v998 = vpop.xlane.xlu0 %997
  %v999 = vsel %vm84, %v993, 0.0
  %1000 = vadd.xlane.f32.xlu0 %v999
  %v1001 = vpop.xlane.xlu0 %1000
  %v1002 = vsel %vm84, %v994, 0.0
  %1003 = vadd.xlane.f32.xlu0 %v1002
  %v1004 = vpop.xlane.xlu0 %1003
  %v1005 = vsel %vm84, %v995, 0.0
  %1006 = vadd.xlane.f32.xlu0 %v1005
  %v1007 = vpop.xlane.xlu0 %1006
  %v1008 = vlaneseq
  %v1009 = vshrl.u32 %v1008, 7
  %v1010 = vsub.s32 4, %v1009
  %v1011 = vrot.slane %v27, %v1010
  %v1012 = vadd.f32 %v998, %v1011
  %v1013 = vadd.f32 %v1001, %v1011
  %v1014 = vadd.f32 %v1004, %v1011
  %v1015 = vadd.f32 %v1007, %v1011
  %1017 = vset.pattern.permute.xlu0 0
  %1018 = vperm.xlu0 %1017, %v1012
  %v1019 = vpop.permute.xlu0 %1018
  %1022 = vset.pattern.permute.xlu0 0
  %1023 = vperm.xlu0 %1022, %v1013
  %v1024 = vpop.permute.xlu0 %1023
  %1027 = vset.pattern.permute.xlu0 0
  %1028 = vperm.xlu0 %1027, %v1014
  %v1029 = vpop.permute.xlu0 %1028
  %1032 = vset.pattern.permute.xlu0 0
  %1033 = vperm.xlu0 %1032, %v1015
  %v1034 = vpop.permute.xlu0 %1033
  %1036 = vst [vmem:[%s7] sm:$0xff] %v1019
  %1037 = vst [vmem:[%s7 + $0x8] sm:$0xff] %v1024
  %1038 = vst [vmem:[%s7 + $0x10] sm:$0xff] %v1029
  %1039 = vst [vmem:[%s7 + $0x18] sm:$0xff] %v1034
  // Predicated region
  $region30: #{multisql_forward.1} parent=0 // pred_check
    _
  $region31: #{multisql_forward.1} parent=0 // pred_check_branch
    %1041 = sbr.rel (0) target = $region33
  $region32: #{multisql_forward.1} parent=0 // pred_region
    _
  $region33: #{multisql_forward.1} parent=0 // pred_fallthru
    _
  // Predicated region
  $region34: #{multisql_forward.1} parent=0 // pred_check
    _
  $region35: #{multisql_forward.1} parent=0 // pred_check_branch
    %1043 = sbr.rel (0) target = $region37
  $region36: #{multisql_forward.1} parent=0 // pred_region
    _
  $region37: #{multisql_forward.1} parent=0 // pred_fallthru
    _

</llo_original>
